<compile_context>
chip_gen: v5e
topology: v5e:2x2
jax: 0.10.0
libtpu: 0.0.40
codegen_flags: <defaults>
</compile_context>

<pallas_src>
import functools

import jax
import jax.numpy as jnp
from jax import lax
from jax.experimental import pallas as pl
from jax.experimental.pallas import tpu as pltpu

_F32_BYTES = 4


def _vmem_capacity_bytes():
    """Physical VMEM per core; conservative fallback if the query fails."""
    try:
        info = pltpu.get_tpu_info()
        cap = getattr(info, "vmem_capacity_bytes", None)
        if cap:
            return int(cap)
    except Exception:
        pass
    return 64 * 1024 * 1024  # v7x per-TensorCore VMEM (smallest across gens)


def _working_set_bytes(b_pad, dim, tile):
    """Rough kernel-2 VMEM working set (incl. pipeline double-buffering)."""
    two_bp = 2 * b_pad
    resident = 2 * two_bp * dim * _F32_BYTES      # reps input, double-buffered
    slabs = 4 * tile * two_bp * _F32_BYTES        # sim + exp + iota/mask temps
    row_tiles = 2 * tile * dim * _F32_BYTES       # reps_t / pair_t slices
    out = 2 * 8 * 128 * _F32_BYTES                # (8,128) partial, dbl-buffered
    return resident + slabs + row_tiles + out


def _pick_row_tile(b_pad, dim, budget_bytes):
    """Largest MXU-friendly row tile dividing b_pad that fits the VMEM budget."""
    for t in (512, 256, 128, 64, 32, 16, 8):
        if b_pad % t == 0 and _working_set_bytes(b_pad, dim, t) <= budget_bytes:
            return t
    return 8  # smallest aligned tile; vmem_limit is raised by the caller


def _l2_normalize_stack_kernel(ei_ref, ej_ref, reps_ref):
    """Row-wise L2 normalization, written into the stacked [z_i; z_j] layout."""
    eps = 1e-12
    ei = ei_ref[...].astype(jnp.float32)            # (T, D)
    ej = ej_ref[...].astype(jnp.float32)            # (T, D)
    # One divide per row, then a broadcast multiply.
    inv_ni = 1.0 / jnp.maximum(
        jnp.sqrt(jnp.sum(ei * ei, axis=1, keepdims=True)), eps)
    inv_nj = 1.0 / jnp.maximum(
        jnp.sqrt(jnp.sum(ej * ej, axis=1, keepdims=True)), eps)
    reps_ref[0] = ei * inv_ni
    reps_ref[1] = ej * inv_nj


def _ntxent_tile_kernel(reps_ref, out_ref, *, tile_rows, b_pad, n_valid, inv_t):
    """Partial NT-Xent loss for one row tile of the stacked reps."""
    two_bp = 2 * b_pad
    r0 = pl.multiple_of(pl.program_id(0) * tile_rows, tile_rows)
    # Tiles never straddle the half boundary (tile_rows divides b_pad), so the
    # positive-pair rows of this tile are a single contiguous slice.
    pair_r0 = jnp.where(r0 < b_pad, r0 + b_pad, r0 - b_pad)

    reps_all = reps_ref[...]                           # (2*b_pad, D) resident
    reps_t = reps_ref[pl.ds(r0, tile_rows), :]         # (T, D)
    pair_t = reps_ref[pl.ds(pair_r0, tile_rows), :]    # (T, D)

    # One wide matmul per tile: (T, D) x (D, 2B) -> (T, 2B).
    dn = (((1,), (1,)), ((), ()))
    sim = lax.dot_general(reps_t, reps_all, dn,
                          preferred_element_type=jnp.float32)

    e = jnp.exp(sim * inv_t)                           # (T, 2B)

    col = lax.broadcasted_iota(jnp.int32, (tile_rows, two_bp), 1)
    row = lax.broadcasted_iota(jnp.int32, (tile_rows, two_bp), 0) + r0

    keep = col != row                                  # mask the k == i diagonal
    if n_valid != b_pad:                               # mask padded cols (static)
        col_valid = jnp.logical_or(
            col < n_valid,
            jnp.logical_and(col >= b_pad, col < b_pad + n_valid))
        keep = jnp.logical_and(keep, col_valid)
    e = jnp.where(keep, e, 0.0)
    denom = jnp.sum(e, axis=1, keepdims=True)          # (T, 1)

    # Positive logit: <z_i[k], z_j[k]> / t (identical for row k and row k+B).
    pos = jnp.sum(reps_t * pair_t, axis=1, keepdims=True) * inv_t   # (T, 1)
    per_row = jnp.log(denom) - pos

    if n_valid != b_pad:                               # drop padded rows (static)
        row_g = row[:, :1]
        row_valid = jnp.logical_or(
            row_g < n_valid,
            jnp.logical_and(row_g >= b_pad, row_g < b_pad + n_valid))
        per_row = jnp.where(row_valid, per_row, 0.0)

    # Lane-dense per-tile partial; reduced (sum / 1024) in the wrapper.
    out_ref[...] = jnp.full((8, 128), jnp.sum(per_row), dtype=jnp.float32)


def contrastive_loss_pallas(emb_i, emb_j, temperature=0.5):
    temperature = float(temperature)
    batch_size, dim = emb_i.shape

    # Pad the batch to a multiple of 8 so row tiles stay (8,128)-aligned;
    # padded rows/columns are masked inside kernel 2.
    b_pad = ((batch_size + 7) // 8) * 8
    if b_pad != batch_size:
        pad = ((0, b_pad - batch_size), (0, 0))
        emb_i = jnp.pad(emb_i, pad)
        emb_j = jnp.pad(emb_j, pad)

    vmem_budget = int(0.7 * _vmem_capacity_bytes())    # ~30% headroom; v7x-safe
    tile = _pick_row_tile(b_pad, dim, vmem_budget)
    num_tiles = (2 * b_pad) // tile                    # always >= 2 (megacore)

    # ---- Kernel 1: normalize + stack into reps = [z_i; z_j]. ----------------
    reps3 = pl.pallas_call(
        _l2_normalize_stack_kernel,
        grid=(b_pad // tile,),
        in_specs=[
            pl.BlockSpec((tile, dim), lambda i: (i, 0)),
            pl.BlockSpec((tile, dim), lambda i: (i, 0)),
        ],
        out_specs=pl.BlockSpec((2, tile, dim), lambda i: (0, i, 0)),
        out_shape=jax.ShapeDtypeStruct((2, b_pad, dim), jnp.float32),
        compiler_params=pltpu.CompilerParams(
            dimension_semantics=("parallel",)),
    )(emb_i, emb_j)
    reps = reps3.reshape(2 * b_pad, dim)               # contiguous -> free reshape

    # ---- Kernel 2: row-tiled NT-Xent partial losses. ------------------------
    working = _working_set_bytes(b_pad, dim, tile)
    vmem_limit = None
    if working > 12 * 1024 * 1024:
        vmem_limit = min(int(1.3 * working), vmem_budget)

    kernel = functools.partial(
        _ntxent_tile_kernel, tile_rows=tile, b_pad=b_pad,
        n_valid=batch_size, inv_t=1.0 / temperature)

    partials = pl.pallas_call(
        kernel,
        grid=(num_tiles,),
        in_specs=[pl.BlockSpec((2 * b_pad, dim), lambda i: (0, 0))],  # resident
        out_specs=pl.BlockSpec((8, 128), lambda i: (i, 0)),
        out_shape=jax.ShapeDtypeStruct((8 * num_tiles, 128), jnp.float32),
        compiler_params=pltpu.CompilerParams(
            dimension_semantics=("parallel",),
            vmem_limit_bytes=vmem_limit),
    )(reps)

    # Each (8,128) block holds 1024 copies of its tile's partial sum.
    total = jnp.sum(partials) * (1.0 / 1024.0)
    # loss = 1/(2N) * sum over all 2N ordered positive pairs (real rows only).
    return total / (2.0 * batch_size)


def contrastive_loss_ref(emb_i, emb_j, temperature=0.5):
    """Pure-JAX reference mirroring the PyTorch forward."""
    eps = 1e-12
    z_i = emb_i / jnp.maximum(
        jnp.linalg.norm(emb_i, axis=1, keepdims=True), eps)
    z_j = emb_j / jnp.maximum(
        jnp.linalg.norm(emb_j, axis=1, keepdims=True), eps)
    reps = jnp.concatenate([z_i, z_j], axis=0)
    sim = reps @ reps.T
    n = emb_i.shape[0]
    n2 = 2 * n
    logits = sim / temperature
    exp_logits = jnp.exp(logits)
    mask = 1.0 - jnp.eye(n2, dtype=jnp.float32)
    denom = jnp.sum(mask * exp_logits, axis=1)
    idx = jnp.arange(n2)
    pair = jnp.where(idx < n, idx + n, idx - n)
    pos = logits[idx, pair]
    per_row = jnp.log(denom) - pos
    return jnp.sum(per_row) / n2


if __name__ == "__main__":
    key = jax.random.PRNGKey(0)
    ki, kj = jax.random.split(key)
    B, D = 8, 32  # batch_size=8, embedding dim=32
    emb_i = jax.random.normal(ki, (B, D), dtype=jnp.float32)
    emb_j = jax.random.normal(kj, (B, D), dtype=jnp.float32)

    loss = contrastive_loss_pallas(emb_i, emb_j, temperature=0.5)
    jax.block_until_ready(loss)
    ref = contrastive_loss_ref(emb_i, emb_j, temperature=0.5)
    assert jnp.allclose(loss, ref, rtol=1e-5, atol=1e-5), (loss, ref)

    # Also exercise the padded-batch path (batch not a multiple of 8).
    B2 = 6
    loss2 = contrastive_loss_pallas(emb_i[:B2], emb_j[:B2], temperature=0.5)
    jax.block_until_ready(loss2)
    ref2 = contrastive_loss_ref(emb_i[:B2], emb_j[:B2], temperature=0.5)
    assert jnp.allclose(loss2, ref2, rtol=1e-5, atol=1e-5), (loss2, ref2)

    print("KERNEL_OK")
</pallas_src>

<mosaic_0001>
module attributes {stable_mosaic.version = 11 : i64} {
  func.func @_l2_normalize_stack_kernel(%arg0: i32, %arg1: memref<8x32xf32, #tpu.memory_space<vmem>>, %arg2: memref<8x32xf32, #tpu.memory_space<vmem>>, %arg3: memref<2x8x32xf32, #tpu.memory_space<vmem>>) attributes {dimension_semantics = [#tpu.dimension_semantics<parallel>], iteration_bounds = array<i64: 1>, scalar_prefetch = 0 : i64, scratch_operands = 0 : i64, tpu.core_type = #tpu.core_type<tc>, window_params = [{transform_indices = @transform_0, window_bounds = array<i64: 8, 32>}, {transform_indices = @transform_1, window_bounds = array<i64: 8, 32>}, {transform_indices = @transform_2, window_bounds = array<i64: 2, 8, 32>}]} {
    %c0 = arith.constant 0 : index
    %c0_0 = arith.constant 0 : index
    %0 = vector.load %arg1[%c0, %c0_0] : memref<8x32xf32, #tpu.memory_space<vmem>>, vector<8x32xf32>
    %c0_1 = arith.constant 0 : index
    %c0_2 = arith.constant 0 : index
    %1 = vector.load %arg2[%c0_1, %c0_2] : memref<8x32xf32, #tpu.memory_space<vmem>>, vector<8x32xf32>
    %2 = arith.mulf %0, %0 : vector<8x32xf32>
    %cst = arith.constant dense<0.000000e+00> : vector<8xf32>
    %3 = vector.multi_reduction <add>, %2, %cst [1] : vector<8x32xf32> to vector<8xf32>
    %4 = vector.shape_cast %3 : vector<8xf32> to vector<8x1xf32>
    %5 = math.sqrt %4 : vector<8x1xf32>
    %cst_3 = arith.constant 9.99999996E-13 : f32
    %6 = vector.broadcast %cst_3 : f32 to vector<8x1xf32>
    %7 = arith.maximumf %5, %6 : vector<8x1xf32>
    %cst_4 = arith.constant 1.000000e+00 : f32
    %8 = vector.broadcast %cst_4 : f32 to vector<8x1xf32>
    %9 = arith.divf %8, %7 : vector<8x1xf32>
    %10 = arith.mulf %1, %1 : vector<8x32xf32>
    %cst_5 = arith.constant dense<0.000000e+00> : vector<8xf32>
    %11 = vector.multi_reduction <add>, %10, %cst_5 [1] : vector<8x32xf32> to vector<8xf32>
    %12 = vector.shape_cast %11 : vector<8xf32> to vector<8x1xf32>
    %13 = math.sqrt %12 : vector<8x1xf32>
    %cst_6 = arith.constant 9.99999996E-13 : f32
    %14 = vector.broadcast %cst_6 : f32 to vector<8x1xf32>
    %15 = arith.maximumf %13, %14 : vector<8x1xf32>
    %cst_7 = arith.constant 1.000000e+00 : f32
    %16 = vector.broadcast %cst_7 : f32 to vector<8x1xf32>
    %17 = arith.divf %16, %15 : vector<8x1xf32>
    %18 = vector.broadcast %9 : vector<8x1xf32> to vector<8x32xf32>
    %19 = arith.mulf %0, %18 : vector<8x32xf32>
    %c0_8 = arith.constant 0 : index
    %c0_9 = arith.constant 0 : index
    %c0_10 = arith.constant 0 : index
    %20 = vector.load %arg3[%c0_8, %c0_9, %c0_10] : memref<2x8x32xf32, #tpu.memory_space<vmem>>, vector<1x8x32xf32>
    %21 = vector.shape_cast %20 : vector<1x8x32xf32> to vector<8x32xf32>
    %22 = vector.shape_cast %19 : vector<8x32xf32> to vector<1x8x32xf32>
    tpu.vector_store %arg3[%c0_8, %c0_9, %c0_10], %22 {strides = array<i32>} : memref<2x8x32xf32, #tpu.memory_space<vmem>>, vector<1x8x32xf32>,
    %23 = vector.broadcast %17 : vector<8x1xf32> to vector<8x32xf32>
    %24 = arith.mulf %1, %23 : vector<8x32xf32>
    %c1 = arith.constant 1 : index
    %c0_11 = arith.constant 0 : index
    %c0_12 = arith.constant 0 : index
    %25 = vector.load %arg3[%c1, %c0_11, %c0_12] : memref<2x8x32xf32, #tpu.memory_space<vmem>>, vector<1x8x32xf32>
    %26 = vector.shape_cast %25 : vector<1x8x32xf32> to vector<8x32xf32>
    %27 = vector.shape_cast %24 : vector<8x32xf32> to vector<1x8x32xf32>
    tpu.vector_store %arg3[%c1, %c0_11, %c0_12], %27 {strides = array<i32>} : memref<2x8x32xf32, #tpu.memory_space<vmem>>, vector<1x8x32xf32>,
    return
  }
  func.func @transform_0(%arg0: i32) -> (i32, i32) {
    %c0_i32 = arith.constant 0 : i32
    %c0_i32_0 = arith.constant 0 : i32
    return %arg0, %c0_i32 : i32, i32
  }
  func.func @transform_1(%arg0: i32) -> (i32, i32) {
    %c0_i32 = arith.constant 0 : i32
    %c0_i32_0 = arith.constant 0 : i32
    return %arg0, %c0_i32 : i32, i32
  }
  func.func @transform_2(%arg0: i32) -> (i32, i32, i32) {
    %c0_i32 = arith.constant 0 : i32
    %c0_i32_0 = arith.constant 0 : i32
    %c0_i32_1 = arith.constant 0 : i32
    return %c0_i32, %arg0, %c0_i32_0 : i32, i32, i32
  }
}

</mosaic_0001>

<llo_original>
// kernel: tpu_custom_call.1
$region0: #{tpu_custom_call.1}
  #allocation0 [shape = 'u32[]', space=smem, size = 0x4, offset = 0x4, fixed_abs, tag = 'smem constant byte address 0x4 - core index']
  #allocation1 [shape = 'u32[72,128]{1,0:T(1,128)}', space=vmem, size = 0x9000, scoped, tag = 'internal scratch']
  %s0 = inlined_call_operand.hbm [shape: f32[8,32], index: 0, kind: input, shape index: {}]
  %s1 = inlined_call_operand.hbm [shape: f32[8,32], index: 1, kind: input, shape index: {}]
  %s2 = inlined_call_operand.hbm [shape: f32[2,8,32], index: 2, kind: output, shape index: {}]
  %s3 = sld [smem:[#allocation0]]
  $region26: #{tpu_custom_call.1} parent=0
    _
  %s5 = ssub.s32 1, %s3
  %s6 = scalar_select 0, %s5, %s3
  $region1: #{tpu_custom_call.1} parent=0
    #allocation2 [shape = 'u8[4096]{0}', space=vmem, size = 0x1000, scoped, tag = 'input window, operand 0, single buffered']
    #allocation3 [shape = 's32[1]{0}', space=sflag, size = 0x4, scoped, tag = 'scoped memory for tpu_custom_call.1']
    #allocation4 [shape = 's32[1]{0}', space=sflag, size = 0x4, scoped, tag = 'scoped memory for tpu_custom_call.1']
    #allocation5 [shape = 'u8[4096]{0}', space=vmem, size = 0x1000, scoped, tag = 'input window, operand 1, single buffered']
    #allocation6 [shape = 's32[1]{0}', space=sflag, size = 0x4, scoped, tag = 'scoped memory for tpu_custom_call.1']
    #allocation7 [shape = 'u8[8192]{0}', space=vmem, size = 0x2000, scoped, tag = 'output window, operand 0, single buffered']
    %7 = vsyncpa [#allocation3], 0
    %8 = vsyncpa [#allocation6], 0
    %9 = vsyncpa [#allocation4], 0
    // Predicated region
    $region2: #{tpu_custom_call.1} parent=1 // pred_check
      _
    $region3: #{tpu_custom_call.1} parent=1 // pred_check_branch
      %11 = sbr.rel (0) target = $region5
    $region4: #{tpu_custom_call.1} parent=1 // pred_region
      %13 = vsyncadd [#allocation3], 0
      %s15 = sshll.u32 %s0, 4
      %s16 = int_to_ptr.hbm [resolvable:$true] %s15
      %s17 = sshll.u32 [#allocation2], 4
      %s18 = int_to_ptr.vmem [resolvable:$true] %s17
      %20 = dma.hbm_to_vmem [thread:$0]  %s16, 128, %s18, [#allocation3]
    $region5: #{tpu_custom_call.1} parent=1 // pred_fallthru
      _
    // Predicated region
    $region6: #{tpu_custom_call.1} parent=1 // pred_check
      _
    $region7: #{tpu_custom_call.1} parent=1 // pred_check_branch
      %22 = sbr.rel (0) target = $region9
    $region8: #{tpu_custom_call.1} parent=1 // pred_region
      %24 = vsyncadd [#allocation6], 0
      %s26 = sshll.u32 %s1, 4
      %s27 = int_to_ptr.hbm [resolvable:$true] %s26
      %s28 = sshll.u32 [#allocation5], 4
      %s29 = int_to_ptr.vmem [resolvable:$true] %s28
      %31 = dma.hbm_to_vmem [thread:$0]  %s27, 128, %s29, [#allocation6]
    $region9: #{tpu_custom_call.1} parent=1 // pred_fallthru
      _
    // Predicated region
    $region10: #{tpu_custom_call.1} parent=1 // pred_check
      _
    $region11: #{tpu_custom_call.1} parent=1 // pred_check_branch
      %33 = sbr.rel (0) target = $region13
    $region12: #{tpu_custom_call.1} parent=1 // pred_region
      %35 = dma.done [#allocation3], 128
    $region13: #{tpu_custom_call.1} parent=1 // pred_fallthru
      _
    // Predicated region
    $region14: #{tpu_custom_call.1} parent=1 // pred_check
      _
    $region15: #{tpu_custom_call.1} parent=1 // pred_check_branch
      %37 = sbr.rel (0) target = $region17
    $region16: #{tpu_custom_call.1} parent=1 // pred_region
      %39 = dma.done [#allocation6], 128
    $region17: #{tpu_custom_call.1} parent=1 // pred_fallthru
      _
    %v40 = vld [vmem:[#allocation2] sm:$0xff]
    %v41 = vld [vmem:[#allocation5] sm:$0xff]
    %v42 = vmul.f32 %v40, %v40
    %vm43 = vcmask 261120
    %v44 = vsel %vm43, %v42, 0.0
    %45 = vadd.xlane.f32.xlu0 %v44
    %v46 = vpop.xlane.xlu0 %45
    %v47 = vrsqrt.pop %v46
    %v48 = vmul.f32 %v47, %v46
    %v49 = vmul.f32 %v48, %v47
    %v50 = vmul.f32 0.5, %v49
    %v51 = vsub.f32 1.5, %v50
    %v52 = vmul.f32 %v47, %v51
    %v53 = vmul.f32 %v46, %v52
    %vm54 = vcmp.eq.f32.partialorder %v46, inf
    %v55 = vsel %vm54, %v46, %v53
    %vm56 = vcmp.eq.f32.partialorder %v46, 0.0
    %v57 = vand.u32 %v46, 2147483648
    %v58 = vsel %vm56, %v57, %v55
    %v59 = vmax.f32 %v58, 1e-12
    %v60 = vrcp.pop %v59
    %v61 = vmul.f32 %v59, %v60
    %v62 = vsub.f32 1.0, %v61
    %v63 = vmul.f32 %v60, %v62
    %v64 = vadd.f32 %v60, %v63
    %vm65 = vweird.f32 %v59
    %vm66 = vweird.f32 %v60
    %vm67 = vmor %vm65, %vm66
    %v68 = vsel %vm67, %v60, %v64
    %v69 = vand.u32 2147483647, %v59
    %vm70 = vcmp.eq.f32.partialorder %v69, 8.507059e+37
    %v71 = vand.u32 %v59, 2147483648
    %v72 = vor.u32 1.1754944e-38, %v71
    %v73 = vsel %vm70, %v72, %v68
    %v74 = vmul.f32 1.0, %v73
    %v75 = vmul.f32 %v41, %v41
    %v76 = vsel %vm43, %v75, 0.0
    %77 = vadd.xlane.f32.xlu0 %v76
    %v78 = vpop.xlane.xlu0 %77
    %v79 = vrsqrt.pop %v78
    %v80 = vmul.f32 %v79, %v78
    %v81 = vmul.f32 %v80, %v79
    %v82 = vmul.f32 0.5, %v81
    %v83 = vsub.f32 1.5, %v82
    %v84 = vmul.f32 %v79, %v83
    %v85 = vmul.f32 %v78, %v84
    %vm86 = vcmp.eq.f32.partialorder %v78, inf
    %v87 = vsel %vm86, %v78, %v85
    %vm88 = vcmp.eq.f32.partialorder %v78, 0.0
    %v89 = vand.u32 %v78, 2147483648
    %v90 = vsel %vm88, %v89, %v87
    %v91 = vmax.f32 %v90, 1e-12
    %v92 = vrcp.pop %v91
    %v93 = vmul.f32 %v91, %v92
    %v94 = vsub.f32 1.0, %v93
    %v95 = vmul.f32 %v92, %v94
    %v96 = vadd.f32 %v92, %v95
    %vm97 = vweird.f32 %v91
    %vm98 = vweird.f32 %v92
    %vm99 = vmor %vm97, %vm98
    %v100 = vsel %vm99, %v92, %v96
    %v101 = vand.u32 2147483647, %v91
    %vm102 = vcmp.eq.f32.partialorder %v101, 8.507059e+37
    %v103 = vand.u32 %v91, 2147483648
    %v104 = vor.u32 1.1754944e-38, %v103
    %v105 = vsel %vm102, %v104, %v100
    %v106 = vmul.f32 1.0, %v105
    %v107 = vmul.f32 %v40, %v74
    %108 = vst.msk [vmem:[#allocation7] sm:$0xff] %vm43, %v107
    %v109 = vmul.f32 %v41, %v106
    %s110 = scalar_lea.vmem [#allocation7], 8
    %111 = vst.msk [vmem:[%s110] sm:$0xff] %vm43, %v109
    // Predicated region
    $region18: #{tpu_custom_call.1} parent=1 // pred_check
      _
    $region19: #{tpu_custom_call.1} parent=1 // pred_check_branch
      %113 = sbr.rel (0) target = $region21
    $region20: #{tpu_custom_call.1} parent=1 // pred_region
      %115 = vsyncadd [#allocation4], 0
      %s116 = sshll.u32 [#allocation7], 4
      %s117 = int_to_ptr.vmem [resolvable:$true] %s116
      %s118 = sshll.u32 %s2, 4
      %s119 = int_to_ptr.hbm [resolvable:$true] %s118
      %124 = dma.vmem_to_hbm [thread:$0]  %s117, 256, %s119, [#allocation4], 128, 128, 8
    $region21: #{tpu_custom_call.1} parent=1 // pred_fallthru
      _
    // Predicated region
    $region22: #{tpu_custom_call.1} parent=1 // pred_check
      _
    $region23: #{tpu_custom_call.1} parent=1 // pred_check_branch
      %126 = sbr.rel (0) target = $region25
    $region24: #{tpu_custom_call.1} parent=1 // pred_region
      %128 = dma.done [#allocation4], 256
    $region25: #{tpu_custom_call.1} parent=1 // pred_fallthru
      _
    %129 = vsyncpa [#allocation3], 1
    %130 = vsyncpa [#allocation6], 1
    %131 = vsyncpa [#allocation4], 1

</llo_original>
